<compile_context>
chip_gen: v6e
topology: v6e:2x2x1
jax: 0.10.0
libtpu: 0.0.40
codegen_flags: <defaults>
</compile_context>

<pallas_src>
import functools

import jax
import jax.numpy as jnp
from jax import lax
from jax.experimental import pallas as pl
from jax.experimental.pallas import tpu as pltpu


# ----------------------------------------------------------------------------
# Kernels
# ----------------------------------------------------------------------------
def _small_linear_kernel(x_ref, w_ref, b_ref, o_ref):
    # Whole problem in VMEM: x (M,K), w (N,K), b (1,N) -> out (M,N).
    acc = lax.dot_general(
        x_ref[...], w_ref[...],
        dimension_numbers=(((1,), (1,)), ((), ())),   # contract K with K
        preferred_element_type=jnp.float32)
    o_ref[...] = (acc + b_ref[...].astype(jnp.float32)).astype(o_ref.dtype)


def _linear_kernel(x_ref, w_ref, b_ref, o_ref, acc_ref):
    k = pl.program_id(2)

    @pl.when(k == 0)
    def _():
        acc_ref[...] = jnp.zeros_like(acc_ref)

    # (tm, tk) x (tn, tk) contracted on K -> (tm, tn), accumulated in f32.
    acc_ref[...] += lax.dot_general(
        x_ref[...], w_ref[...],
        dimension_numbers=(((1,), (1,)), ((), ())),
        preferred_element_type=jnp.float32)

    @pl.when(k == pl.num_programs(2) - 1)
    def _():
        o_ref[...] = (acc_ref[...] + b_ref[...].astype(jnp.float32)
                      ).astype(o_ref.dtype)


# ----------------------------------------------------------------------------
# Tile selection / helpers
# ----------------------------------------------------------------------------
def _round_up(x, m):
    return ((x + m - 1) // m) * m


_VMEM_BUDGET = 48 * 1024 * 1024   # keep kernel buffers under v7x's 64 MiB
_SMALL_BYTES = 4 * 1024 * 1024    # single-block fast-path threshold


def _choose_tiles(M, N, K, elem_bytes, out_bytes):
    """256-aligned tiles sized for the v6e/v7x 2x256x256 MXU, fitting ~48MiB."""
    Np128 = _round_up(N, 128)
    # Whole-N tile when out_features is modest: x and W each stream from HBM
    # exactly once (removes the Np/tn re-read factor).
    tn = Np128 if Np128 <= 2048 else 512

    tm = min(512, _round_up(M, 256))

    # Give v7x's two TensorCores work on a parallel axis when possible.
    if _round_up(M, tm) // tm == 1 and _round_up(N, tn) // tn == 1 and M > 256:
        tm = max(256, _round_up((M + 1) // 2, 256))

    # Largest 256-aligned tk that keeps double-buffered x/W tiles, the
    # double-buffered output, the f32 accumulator and the bias in budget.
    fixed = 2 * tm * tn * out_bytes + tm * tn * 4 + 2 * tn * 4
    per_k = 2 * (tm + tn) * elem_bytes
    tk_cap = max(256, ((_VMEM_BUDGET - fixed) // per_k) // 256 * 256)
    tk = min(_round_up(K, 256), tk_cap)
    tk = min(tk, 2048 if elem_bytes >= 4 else 4096)
    return tm, tn, max(tk, 256)


# ----------------------------------------------------------------------------
# Wrapper: CondLinear forward
# ----------------------------------------------------------------------------
@functools.partial(jax.jit, static_argnames=("tm", "tn", "tk", "compute_dtype"))
def cond_linear(inputs, w, b=None, *, tm=None, tn=None, tk=None,
                compute_dtype=None):
    """CondLinear forward: (img, label) -> (img @ W^T + b, label)."""
    img, label = inputs
    M, K = img.shape
    N, K2 = w.shape
    assert K == K2, "in_features mismatch"
    out_dtype = img.dtype

    if b is None:
        b = jnp.zeros((N,), dtype=out_dtype)
    b2 = b.reshape(1, N)

    # Cast BEFORE any padding so pad copies (if any) move half the bytes.
    x = img
    wt = w  # (N, K) -- used directly, no transpose materialization.
    if compute_dtype is not None:
        x = x.astype(compute_dtype)
        wt = wt.astype(compute_dtype)

    elem_bytes = jnp.dtype(x.dtype).itemsize
    out_bytes = jnp.dtype(out_dtype).itemsize
    io_bytes = (M * K + N * K) * elem_bytes + M * N * out_bytes + N * 4
    cost = pl.CostEstimate(flops=2 * M * N * K, transcendentals=0,
                           bytes_accessed=io_bytes)

    # ---------------- small-shape fast path: one block, no grid --------------
    small_bytes = ((M * K + N * K) * elem_bytes
                   + M * N * (out_bytes + 4) + N * 4)
    if small_bytes <= _SMALL_BYTES and tm is None and tn is None and tk is None:
        out = pl.pallas_call(
            _small_linear_kernel,
            out_shape=jax.ShapeDtypeStruct((M, N), out_dtype),
            cost_estimate=cost,
        )(x, wt, b2)
        return out, label

    # ---------------- tiled path ---------------------------------------------
    tm_d, tn_d, tk_d = _choose_tiles(M, N, K, elem_bytes, out_bytes)
    tm = tm_d if tm is None else tm
    tn = tn_d if tn is None else tn
    tk = tk_d if tk is None else tk

    Mp, Np, Kp = _round_up(M, tm), _round_up(N, tn), _round_up(K, tk)

    # Pad only when shapes are not already tile multiples (zero K-padding
    # contributes nothing to the accumulation).
    if (Mp, Kp) != (M, K):
        x = jnp.pad(x, ((0, Mp - M), (0, Kp - K)))
    if (Np, Kp) != (N, K):
        wt = jnp.pad(wt, ((0, Np - N), (0, Kp - K)))
    if Np != N:
        b2 = jnp.pad(b2, ((0, 0), (0, Np - N)))

    grid = (Mp // tm, Np // tn, Kp // tk)

    vmem_need = (2 * tm * tk * elem_bytes       # x tiles, double-buffered
                 + 2 * tk * tn * elem_bytes     # W tiles, double-buffered
                 + 2 * tm * tn * out_bytes      # out tiles, double-buffered
                 + tm * tn * 4                  # f32 accumulator
                 + 2 * tn * 4)                  # bias
    vmem_limit = min(max(vmem_need + (2 << 20), 32 << 20), 56 << 20)

    out = pl.pallas_call(
        _linear_kernel,
        out_shape=jax.ShapeDtypeStruct((Mp, Np), out_dtype),
        grid_spec=pltpu.PrefetchScalarGridSpec(
            num_scalar_prefetch=0,
            grid=grid,
            in_specs=[
                pl.BlockSpec((tm, tk), lambda i, j, k: (i, k)),   # x tile
                pl.BlockSpec((tn, tk), lambda i, j, k: (j, k)),   # W tile (N,K)
                pl.BlockSpec((1, tn), lambda i, j, k: (0, j)),    # bias tile
            ],
            out_specs=pl.BlockSpec((tm, tn), lambda i, j, k: (i, j)),
            scratch_shapes=[pltpu.VMEM((tm, tn), jnp.float32)],
        ),
        compiler_params=pltpu.CompilerParams(
            dimension_semantics=("parallel", "parallel", "arbitrary"),
            vmem_limit_bytes=vmem_limit),
        cost_estimate=cost,
    )(x, wt, b2)

    if (Mp, Np) != (M, N):
        out = out[:M, :N]
    # Label pass-through is an identity -- no kernel work needed.
    return out, label


# ----------------------------------------------------------------------------
# Self-test
# ----------------------------------------------------------------------------
if __name__ == "__main__":
    key = jax.random.PRNGKey(0)

    # ---- small shapes (exercise the single-block fast path) ----
    batch, in_features, out_features = 8, 32, 16
    kx, kw, kb, kl, key = jax.random.split(key, 5)
    bound = 1.0 / (in_features ** 0.5)
    w = jax.random.uniform(kw, (out_features, in_features),
                           minval=-bound, maxval=bound, dtype=jnp.float32)
    b = jax.random.uniform(kb, (out_features,),
                           minval=-bound, maxval=bound, dtype=jnp.float32)
    img = jax.random.normal(kx, (batch, in_features), dtype=jnp.float32)
    label = jax.random.randint(kl, (batch,), 0, 10, dtype=jnp.int32)

    out, label_out = cond_linear((img, label), w, b)
    out = jax.block_until_ready(out)
    ref = img @ w.T + b
    assert out.shape == (batch, out_features)
    assert out.dtype == img.dtype
    assert jnp.allclose(out, ref, atol=1e-5, rtol=1e-5), "small-path mismatch"
    assert jnp.array_equal(label_out, label), "label must pass through unchanged"

    # ---- larger shapes (exercise the tiled 256-aligned path) ----
    M2, K2_, N2 = 1024, 2048, 256
    kx2, kw2, kb2, kl2, key = jax.random.split(key, 5)
    bound2 = 1.0 / (K2_ ** 0.5)
    w2 = jax.random.uniform(kw2, (N2, K2_), minval=-bound2, maxval=bound2,
                            dtype=jnp.float32)
    b2 = jax.random.uniform(kb2, (N2,), minval=-bound2, maxval=bound2,
                            dtype=jnp.float32)
    img2 = jax.random.normal(kx2, (M2, K2_), dtype=jnp.float32)
    label2 = jax.random.randint(kl2, (M2,), 0, 10, dtype=jnp.int32)

    out2, label2_out = cond_linear((img2, label2), w2, b2)
    out2 = jax.block_until_ready(out2)
    ref2 = img2 @ w2.T + b2
    assert out2.shape == (M2, N2)
    assert jnp.allclose(out2, ref2, atol=2e-2, rtol=2e-2), "tiled-path mismatch"
    assert jnp.array_equal(label2_out, label2)

    print("KERNEL_OK")
</pallas_src>

<mosaic_0001>
module attributes {stable_mosaic.version = 11 : i64} {
  func.func @_small_linear_kernel(%arg0: memref<8x32xf32, #tpu.memory_space<vmem>>, %arg1: memref<16x32xf32, #tpu.memory_space<vmem>>, %arg2: memref<1x16xf32, #tpu.memory_space<vmem>>, %arg3: memref<8x16xf32, #tpu.memory_space<vmem>>) attributes {dimension_semantics = [], scalar_prefetch = 0 : i64, scratch_operands = 0 : i64, tpu.core_type = #tpu.core_type<tc>} {
    %c0 = arith.constant 0 : index
    %c0_0 = arith.constant 0 : index
    %0 = vector.load %arg0[%c0, %c0_0] : memref<8x32xf32, #tpu.memory_space<vmem>>, vector<8x32xf32>
    %c0_1 = arith.constant 0 : index
    %c0_2 = arith.constant 0 : index
    %1 = vector.load %arg1[%c0_1, %c0_2] : memref<16x32xf32, #tpu.memory_space<vmem>>, vector<16x32xf32>
    %cst = arith.constant dense<0.000000e+00> : vector<8x16xf32>
    %2 = tpu.matmul %0, %1, %cst {dimension_numbers = #tpu.dot_dimension_numbers<[1], [1], [0], [0], [0, 0, 1, 0], [], []>} : vector<8x32xf32>, vector<16x32xf32>, vector<8x16xf32> -> vector<8x16xf32>
    %c0_3 = arith.constant 0 : index
    %c0_4 = arith.constant 0 : index
    %3 = vector.load %arg2[%c0_3, %c0_4] : memref<1x16xf32, #tpu.memory_space<vmem>>, vector<1x16xf32>
    %4 = vector.broadcast %3 : vector<1x16xf32> to vector<8x16xf32>
    %5 = arith.addf %2, %4 : vector<8x16xf32>
    %c0_5 = arith.constant 0 : index
    %c0_6 = arith.constant 0 : index
    %6 = vector.load %arg3[%c0_5, %c0_6] : memref<8x16xf32, #tpu.memory_space<vmem>>, vector<8x16xf32>
    tpu.vector_store %arg3[%c0_5, %c0_6], %5 {strides = array<i32>} : memref<8x16xf32, #tpu.memory_space<vmem>>, vector<8x16xf32>,
    return
  }
}

</mosaic_0001>

<llo_original>
// kernel: cond_linear.1
$region0: #{cond_linear.1}
  #allocation0 [shape = 'u32[]', space=smem, size = 0x4, offset = 0x4, fixed_abs, tag = 'smem constant byte address 0x4 - core index']
  #allocation1 [shape = 'u32[144,128]{1,0:T(1,128)}', space=vmem, size = 0x12000, scoped, tag = 'internal scratch']
  %s0 = inlined_call_operand.hbm [shape: f32[8,32], index: 0, kind: input, shape index: {}]
  %s1 = inlined_call_operand.hbm [shape: f32[16,32], index: 1, kind: input, shape index: {}]
  %s2 = inlined_call_operand.vmem [shape: f32[1,16], index: 2, kind: input, shape index: {}]
  %s3 = inlined_call_operand.hbm [shape: f32[8,16], index: 3, kind: output, shape index: {}]
  %s4 = sld [smem:[#allocation0]]
  $region30: #{cond_linear.1} parent=0
    _
  %s6 = ssub.s32 1, %s4
  %s7 = scalar_select 0, %s6, %s4
  $region1: #{cond_linear.1} parent=0
    #allocation2 [shape = 'u8[4096]{0}', space=vmem, size = 0x1000, scoped, tag = 'input window, operand 0, single buffered']
    #allocation3 [shape = 's32[1]{0}', space=sflag, size = 0x4, scoped, tag = 'scoped memory for cond_linear.1']
    #allocation4 [shape = 's32[1]{0}', space=sflag, size = 0x4, scoped, tag = 'scoped memory for cond_linear.1']
    #allocation5 [shape = 'u8[8192]{0}', space=vmem, size = 0x2000, scoped, tag = 'input window, operand 1, single buffered']
    #allocation6 [shape = 's32[1]{0}', space=sflag, size = 0x4, scoped, tag = 'scoped memory for cond_linear.1']
    #allocation7 [shape = 'u8[4096]{0}', space=vmem, size = 0x1000, scoped, tag = 'output window, operand 0, single buffered']
    %8 = vsyncpa [#allocation3], 0
    %9 = vsyncpa [#allocation6], 0
    %10 = vsyncpa [#allocation4], 0
    // Predicated region
    $region2: #{cond_linear.1} parent=1 // pred_check
      _
    $region3: #{cond_linear.1} parent=1 // pred_check_branch
      %12 = sbr.rel (0) target = $region5
    $region4: #{cond_linear.1} parent=1 // pred_region
      %s14 = ssub.s32 128, 128
      %15 = vsyncadd [#allocation3], %s14
      %s17 = sshll.u32 [#allocation2], 4
      %s18 = int_to_ptr.vmem [resolvable:$true] %s17
      %20 = dma.hbm_to_vmem [thread:$0]  %s0, 128, %s18, [#allocation3]
    $region5: #{cond_linear.1} parent=1 // pred_fallthru
      _
    // Predicated region
    $region6: #{cond_linear.1} parent=1 // pred_check
      _
    $region7: #{cond_linear.1} parent=1 // pred_check_branch
      %22 = sbr.rel (0) target = $region9
    $region8: #{cond_linear.1} parent=1 // pred_region
      %s24 = ssub.s32 256, 256
      %25 = vsyncadd [#allocation6], %s24
      %s26 = sshll.u32 [#allocation5], 4
      %s27 = int_to_ptr.vmem [resolvable:$true] %s26
      %32 = dma.hbm_to_vmem [thread:$0]  %s1, 256, %s27, [#allocation6], 128, 128, 8
    $region9: #{cond_linear.1} parent=1 // pred_fallthru
      _
    // Predicated region
    $region10: #{cond_linear.1} parent=1 // pred_check
      _
    $region11: #{cond_linear.1} parent=1 // pred_check_branch
      %34 = sbr.rel (0) target = $region13
    $region12: #{cond_linear.1} parent=1 // pred_region
      _
    $region13: #{cond_linear.1} parent=1 // pred_fallthru
      _
    // Predicated region
    $region14: #{cond_linear.1} parent=1 // pred_check
      _
    $region15: #{cond_linear.1} parent=1 // pred_check_branch
      %36 = sbr.rel (0) target = $region17
    $region16: #{cond_linear.1} parent=1 // pred_region
      %37 = dma.done [#allocation3], 128
    $region17: #{cond_linear.1} parent=1 // pred_fallthru
      _
    // Predicated region
    $region18: #{cond_linear.1} parent=1 // pred_check
      _
    $region19: #{cond_linear.1} parent=1 // pred_check_branch
      %39 = sbr.rel (0) target = $region21
    $region20: #{cond_linear.1} parent=1 // pred_region
      %40 = dma.done [#allocation6], 256
    $region21: #{cond_linear.1} parent=1 // pred_fallthru
      _
    %v41 = vld [vmem:[#allocation2] sm:$0xff]
    %v42 = vld [vmem:[#allocation5] sm:$0xff]
    %v43 = vld [vmem:[#allocation5 + $0x8] sm:$0xff]
    %v44 = vld [vmem:[%s2] sm:$0x1]
    %v46 = vlaneseq
    %v47 = vshrl.u32 %v46, 7
    %v48 = vsub.s32 0, %v47
    %v49 = vrot.slane %v44, %v48
    %vm51 = vcmask 261120
    %v53 = vsel %vm51, %v41, 0
    %v56 = vsel %vm51, %v42, 0
    %v59 = vsel %vm51, %v43, 0
    %61 = vmatprep.subr.mxu0 0.0
    %62 = vmatpush1.xpose.msra.mxu0 0.0
    %63 = vmatprep.subr.mxu0 0.0
    %64 = vmatpush1.xpose.msra.mxu0 0.0
    %65 = vmatprep.subr.mxu0 0.0
    %66 = vmatpush1.xpose.msra.mxu0 0.0
    %67 = vmatprep.subr.mxu0 0.0
    %68 = vmatpush1.xpose.msra.mxu0 0.0
    %69 = vmatprep.subr.mxu0 0.0
    %70 = vmatpush1.xpose.msra.mxu0 0.0
    %71 = vmatprep.subr.mxu0 0.0
    %72 = vmatpush1.xpose.msra.mxu0 0.0
    %73 = vmatprep.subr.mxu0 0.0
    %74 = vmatpush1.xpose.msra.mxu0 0.0
    %75 = vmatprep.subr.mxu0 0.0
    %76 = vmatpush1.xpose.msra.mxu0 0.0
    %77 = vmatprep.subr.mxu0 0.0
    %78 = vmatpush1.xpose.msra.mxu0 0.0
    %79 = vmatprep.subr.mxu0 0.0
    %80 = vmatpush1.xpose.msra.mxu0 0.0
    %81 = vmatprep.subr.mxu0 0.0
    %82 = vmatpush1.xpose.msra.mxu0 0.0
    %83 = vmatprep.subr.mxu0 0.0
    %84 = vmatpush1.xpose.msra.mxu0 0.0
    %85 = vmatprep.subr.mxu0 0.0
    %86 = vmatpush1.xpose.msra.mxu0 0.0
    %87 = vmatprep.subr.mxu0 0.0
    %88 = vmatpush1.xpose.msra.mxu0 0.0
    %89 = vmatprep.subr.mxu0 0.0
    %90 = vmatpush1.xpose.msra.mxu0 %v59
    %91 = vmatprep.subr.mxu0 0.0
    %92 = vmatpush1.xpose.msra.mxu0 %v56
    %93 = vmatprep.subr.mxu0 0.0
    %94 = vmatpush2.xpose.msra.mxu0 0.0
    %95 = vmatprep.subr.mxu0 0.0
    %96 = vmatpush2.xpose.msra.mxu0 0.0
    %97 = vmatprep.subr.mxu0 0.0
    %98 = vmatpush2.xpose.msra.mxu0 0.0
    %99 = vmatprep.subr.mxu0 0.0
    %100 = vmatpush2.xpose.msra.mxu0 0.0
    %101 = vmatprep.subr.mxu0 0.0
    %102 = vmatpush2.xpose.msra.mxu0 0.0
    %103 = vmatprep.subr.mxu0 0.0
    %104 = vmatpush2.xpose.msra.mxu0 0.0
    %105 = vmatprep.subr.mxu0 0.0
    %106 = vmatpush2.xpose.msra.mxu0 0.0
    %107 = vmatprep.subr.mxu0 0.0
    %108 = vmatpush2.xpose.msra.mxu0 0.0
    %109 = vmatprep.subr.mxu0 0.0
    %110 = vmatpush2.xpose.msra.mxu0 0.0
    %111 = vmatprep.subr.mxu0 0.0
    %112 = vmatpush2.xpose.msra.mxu0 0.0
    %113 = vmatprep.subr.mxu0 0.0
    %114 = vmatpush2.xpose.msra.mxu0 0.0
    %115 = vmatprep.subr.mxu0 0.0
    %116 = vmatpush2.xpose.msra.mxu0 0.0
    %117 = vmatprep.subr.mxu0 0.0
    %118 = vmatpush2.xpose.msra.mxu0 0.0
    %119 = vmatprep.subr.mxu0 0.0
    %120 = vmatpush2.xpose.msra.mxu0 0.0
    %121 = vmatprep.subr.mxu0 0.0
    %122 = vmatpush2.xpose.msra.mxu0 0.0
    %123 = vmatprep.subr.mxu0 0.0
    %124 = vmatpush2.xpose.msra.mxu0 0.0
    %125 = vmatprep.mubr.f32.mxu0 0.0
    %126 = vmatmul.mubr.f32.gmra.mxu0 %v53
    %v127 = vpop.f32.mrf.mxu0
    %v128 = vadd.f32 %v49, %v127
    %v129 = vpop.f32.mrf.mxu0
    %130 = vdwg.mxu0
    %vm131 = vcmask 130048
    %132 = vst.msk [vmem:[#allocation7] sm:$0xff] %vm131, %v128
    // Predicated region
    $region22: #{cond_linear.1} parent=1 // pred_check
      _
    $region23: #{cond_linear.1} parent=1 // pred_check_branch
      %134 = sbr.rel (0) target = $region25
    $region24: #{cond_linear.1} parent=1 // pred_region
      %s136 = ssub.s32 128, 128
      %137 = vsyncadd [#allocation4], %s136
      %s139 = sshll.u32 [#allocation7], 4
      %s140 = int_to_ptr.vmem [resolvable:$true] %s139
      %142 = dma.vmem_to_hbm [thread:$0]  %s140, 128, %s3, [#allocation4]
    $region25: #{cond_linear.1} parent=1 // pred_fallthru
      _
    // Predicated region
    $region26: #{cond_linear.1} parent=1 // pred_check
      _
    $region27: #{cond_linear.1} parent=1 // pred_check_branch
      %144 = sbr.rel (0) target = $region29
    $region28: #{cond_linear.1} parent=1 // pred_region
      %145 = dma.done [#allocation4], 128
    $region29: #{cond_linear.1} parent=1 // pred_fallthru
      _
    %146 = vsyncpa [#allocation3], 1
    %147 = vsyncpa [#allocation6], 1
    %148 = vsyncpa [#allocation4], 1

</llo_original>
